<compile_context>
chip_gen: v6e
topology: v6e:2x2x1
jax: 0.10.0
libtpu: 0.0.40
codegen_flags: <defaults>
</compile_context>

<pallas_src>
from functools import partial

import jax
import jax.numpy as jnp
from jax.experimental import pallas as pl
from jax.experimental.pallas import tpu as pltpu


def glu_kernel(x_ref, w_ref, b_ref, out_ref, score_ref, *,
               tm, n_rows, ragged, low_precision_gate):
    # x_ref:     [TM, Dp]        input row tile (pipelined)
    # w_ref:     [Dp, Dp]        pre-transposed weight [in, out], whole-array resident in VMEM
    # b_ref:     [1, Dp]         bias, whole-array resident in VMEM
    # out_ref:   [TM, Dp]        gated output tile
    # score_ref: [1, 1, 1]       per-tile partial count of (y > 0)
    x = x_ref[...]

    # Linear layer on the MXU: x @ W^T == x @ Wt (Wt pre-transposed in the wrapper),
    # accumulated in f32.
    y = jnp.dot(x, w_ref[...], preferred_element_type=jnp.float32)
    y = y + b_ref[...].astype(jnp.float32)

    # Gate: relu6(y) / 6, then elementwise multiply with x.
    x1 = jnp.clip(y, 0.0, 6.0) * (1.0 / 6.0)
    if low_precision_gate:
        # bf16 inputs: gate in the input dtype (native VPU on v6e/v7x), no f32 upcast of x.
        out_ref[...] = x1.astype(out_ref.dtype) * x
    else:
        out_ref[...] = (x1 * x.astype(jnp.float32)).astype(out_ref.dtype)

    # Per-tile partial score: count of (y > 0).  Padded feature columns have y == 0 exactly
    # (zero weight columns + zero bias) so they never contribute.
    pos = jnp.where(y > 0.0, 1.0, 0.0)

    def _store_count(p):
        cnt = jnp.sum(p, axis=1, keepdims=True)        # (TM, 1)   lane reduce
        cnt = jnp.sum(cnt, axis=0, keepdims=True)      # (1, 1)    sublane reduce
        score_ref[...] = cnt.reshape(1, 1, 1)

    if not ragged:
        # N % TM == 0: every tile is full, no masking work at all.
        _store_count(pos)
    else:
        is_last = pl.program_id(0) == pl.num_programs(0) - 1

        @pl.when(jnp.logical_not(is_last))
        def _():
            _store_count(pos)

        @pl.when(is_last)
        def _():
            # Only the last (ragged) tile pays for the row-validity mask.
            row = pl.program_id(0) * tm + jax.lax.broadcasted_iota(jnp.int32, (tm, 1), 0)
            _store_count(jnp.where(row < n_rows, pos, 0.0))


def glu_forward(x, weight, bias):
    """x: [bs, seq_len, d_model]; weight: [d_model, d_model] (PyTorch [out, in] layout);
    bias: [d_model].  Returns (out [bs, seq_len, d_model], score scalar)."""
    bs, seq_len, d_model = x.shape
    N = bs * seq_len
    D = d_model
    Dp = max(128, ((D + 127) // 128) * 128)          # lane-dense (128-aligned) feature dim

    # --- generation-aware tile / VMEM policy ---------------------------------------------
    try:
        vmem_cap = int(pltpu.get_tpu_info().vmem_capacity_bytes)
    except Exception:
        vmem_cap = 64 << 20                          # conservative (v7x-sized) fallback
    if vmem_cap >= (100 << 20):                      # v5e / v6e: 128 MiB physical VMEM
        tm_cap, vmem_ceiling = 1024, 100 << 20
    else:                                            # v7x: 64 MiB physical VMEM
        tm_cap, vmem_ceiling = 256, 52 << 20

    isz_x = jnp.dtype(x.dtype).itemsize
    isz_w = jnp.dtype(weight.dtype).itemsize

    def vmem_est(tm):
        return (2 * tm * Dp * isz_x                  # x tiles (double-buffered)
                + 2 * tm * Dp * isz_x                # out tiles (double-buffered)
                + Dp * Dp * isz_w                    # resident weight (single copy)
                + Dp * isz_w                         # resident bias
                + 2 * 8 * 128 * 4                    # score partial blocks (padded tiles)
                + 3 * tm * Dp * 4)                   # live f32 intermediates (y, x1, pos)

    TM = tm_cap if N >= tm_cap else N
    while TM >= 16 and TM % 16 == 0 and vmem_est(TM) > vmem_ceiling:
        TM //= 2
    num_tiles = pl.cdiv(N, TM)
    ragged = (N % TM) != 0
    vmem_limit = int(min(max(int(1.5 * vmem_est(TM)), 16 << 20), vmem_ceiling))

    # --- pre-transpose + pad once in HBM ---------------------------------------------------
    x2d = x.reshape(N, D)
    wt = weight.T                                    # [in, out]: kernel does plain x @ Wt
    b2d = bias.reshape(1, D)
    if Dp != D:
        x2d = jnp.pad(x2d, ((0, 0), (0, Dp - D)))
        wt = jnp.pad(wt, ((0, Dp - D), (0, Dp - D)))
        b2d = jnp.pad(b2d, ((0, 0), (0, Dp - D)))

    cost = pl.CostEstimate(
        flops=2 * N * Dp * Dp + 5 * N * Dp,
        transcendentals=0,
        bytes_accessed=2 * N * Dp * isz_x + Dp * Dp * isz_w + Dp * isz_w + num_tiles * 4,
    )

    out2d, partials = pl.pallas_call(
        partial(glu_kernel, tm=TM, n_rows=N, ragged=ragged,
                low_precision_gate=(x.dtype != jnp.float32)),
        grid=(num_tiles,),
        in_specs=[
            pl.BlockSpec((TM, Dp), lambda i: (i, 0)),                  # x tile (pipelined)
            pl.BlockSpec(memory_space=pltpu.MemorySpace.VMEM),         # weight: whole array, 1 copy
            pl.BlockSpec(memory_space=pltpu.MemorySpace.VMEM),         # bias:   whole array, 1 copy
        ],
        out_specs=[
            pl.BlockSpec((TM, Dp), lambda i: (i, 0)),                  # gated output tile
            pl.BlockSpec((1, 1, 1), lambda i: (i, 0, 0)),              # per-tile (y > 0) count
        ],
        out_shape=[
            jax.ShapeDtypeStruct((N, Dp), x.dtype),
            jax.ShapeDtypeStruct((num_tiles, 1, 1), jnp.float32),
        ],
        compiler_params=pltpu.CompilerParams(
            dimension_semantics=("parallel",),
            vmem_limit_bytes=vmem_limit,
        ),
        cost_estimate=cost,
    )(x2d, wt, b2d)

    # Final reduction of per-tile counts in int32 (exact for large N*D), then the mean.
    total = jnp.sum(partials.astype(jnp.int32))
    score = total.astype(jnp.float32) / jnp.float32(N * D)

    out2d = out2d[:, :D] if Dp != D else out2d
    return out2d.reshape(bs, seq_len, D), score


if __name__ == "__main__":
    bs, seq_len, d_model = 2, 8, 32

    key = jax.random.PRNGKey(0)
    kx, kw, kb = jax.random.split(key, 3)

    # Deterministic parameter init mimicking nn.Linear (uniform in +/- 1/sqrt(d_model)).
    bound = 1.0 / jnp.sqrt(jnp.float32(d_model))
    weight = jax.random.uniform(kw, (d_model, d_model), jnp.float32, -bound, bound)
    bias = jax.random.uniform(kb, (d_model,), jnp.float32, -bound, bound)

    x = jax.random.normal(kx, (bs, seq_len, d_model), jnp.float32)

    out, score = glu_forward(x, weight, bias)
    jax.block_until_ready((out, score))

    # Reference check in plain JAX.
    y_ref = x @ weight.T + bias
    x1_ref = jnp.clip(y_ref, 0.0, 6.0) / 6.0
    out_ref = x1_ref * x
    score_ref = jnp.mean(jnp.sign(x1_ref))
    assert jnp.allclose(out, out_ref, atol=1e-5, rtol=1e-5)
    assert jnp.allclose(score, score_ref, atol=1e-6)

    print("KERNEL_OK")
</pallas_src>

<mosaic_0001>
module attributes {stable_mosaic.version = 11 : i64} {
  func.func @glu_kernel(%arg0: i32, %arg1: memref<16x128xf32, #tpu.memory_space<vmem>>, %arg2: memref<128x128xf32, #tpu.memory_space<vmem>>, %arg3: memref<1x128xf32, #tpu.memory_space<vmem>>, %arg4: memref<16x128xf32, #tpu.memory_space<vmem>>, %arg5: memref<1x1x1xf32, #tpu.memory_space<vmem>>) attributes {dimension_semantics = [#tpu.dimension_semantics<parallel>], iteration_bounds = array<i64: 1>, scalar_prefetch = 0 : i64, scratch_operands = 0 : i64, tpu.core_type = #tpu.core_type<tc>, window_params = [{transform_indices = @transform_0, window_bounds = array<i64: 16, 128>}, {pipeline_mode = #tpu.pipeline_mode<synchronous>, transform_indices = @transform_1, window_bounds = array<i64: 128, 128>}, {pipeline_mode = #tpu.pipeline_mode<synchronous>, transform_indices = @transform_2, window_bounds = array<i64: 1, 128>}, {transform_indices = @transform_3, window_bounds = array<i64: 16, 128>}, {transform_indices = @transform_4, window_bounds = array<i64: 1, 1, 1>}]} {
    %c0 = arith.constant 0 : index
    %c0_0 = arith.constant 0 : index
    %0 = vector.load %arg1[%c0, %c0_0] : memref<16x128xf32, #tpu.memory_space<vmem>>, vector<16x128xf32>
    %c0_1 = arith.constant 0 : index
    %c0_2 = arith.constant 0 : index
    %1 = vector.load %arg2[%c0_1, %c0_2] : memref<128x128xf32, #tpu.memory_space<vmem>>, vector<128x128xf32>
    %cst = arith.constant dense<0.000000e+00> : vector<16x128xf32>
    %2 = tpu.matmul %0, %1, %cst {dimension_numbers = #tpu.dot_dimension_numbers<[1], [0], [0], [1], [0, 0, 1, 1], [], []>} : vector<16x128xf32>, vector<128x128xf32>, vector<16x128xf32> -> vector<16x128xf32>
    %c0_3 = arith.constant 0 : index
    %c0_4 = arith.constant 0 : index
    %3 = vector.load %arg3[%c0_3, %c0_4] : memref<1x128xf32, #tpu.memory_space<vmem>>, vector<1x128xf32>
    %4 = vector.broadcast %3 : vector<1x128xf32> to vector<16x128xf32>
    %5 = arith.addf %2, %4 : vector<16x128xf32>
    %cst_5 = arith.constant 0.000000e+00 : f32
    %cst_6 = arith.constant 6.000000e+00 : f32
    %6 = vector.broadcast %cst_5 : f32 to vector<16x128xf32>
    %7 = arith.maximumf %6, %5 : vector<16x128xf32>
    %8 = vector.broadcast %cst_6 : f32 to vector<16x128xf32>
    %9 = arith.minimumf %8, %7 : vector<16x128xf32>
    %cst_7 = arith.constant 0.166666672 : f32
    %10 = vector.broadcast %cst_7 : f32 to vector<16x128xf32>
    %11 = arith.mulf %9, %10 : vector<16x128xf32>
    %12 = arith.mulf %11, %0 : vector<16x128xf32>
    %c0_8 = arith.constant 0 : index
    %c0_9 = arith.constant 0 : index
    %13 = vector.load %arg4[%c0_8, %c0_9] : memref<16x128xf32, #tpu.memory_space<vmem>>, vector<16x128xf32>
    tpu.vector_store %arg4[%c0_8, %c0_9], %12 {strides = array<i32>} : memref<16x128xf32, #tpu.memory_space<vmem>>, vector<16x128xf32>,
    %cst_10 = arith.constant 0.000000e+00 : f32
    %14 = vector.broadcast %cst_10 : f32 to vector<16x128xf32>
    %15 = arith.cmpf ogt, %5, %14 : vector<16x128xf32>
    %cst_11 = arith.constant 1.000000e+00 : f32
    %cst_12 = arith.constant 0.000000e+00 : f32
    %16 = vector.broadcast %cst_11 : f32 to vector<16x128xf32>
    %17 = vector.broadcast %cst_12 : f32 to vector<16x128xf32>
    %18 = arith.select %15, %16, %17 : vector<16x128xi1>, vector<16x128xf32>
    %cst_13 = arith.constant dense<0.000000e+00> : vector<16xf32>
    %19 = vector.multi_reduction <add>, %18, %cst_13 [1] : vector<16x128xf32> to vector<16xf32>
    %20 = vector.shape_cast %19 : vector<16xf32> to vector<16x1xf32>
    %cst_14 = arith.constant dense<0.000000e+00> : vector<1xf32>
    %21 = vector.multi_reduction <add>, %20, %cst_14 [0] : vector<16x1xf32> to vector<1xf32>
    %22 = vector.shape_cast %21 : vector<1xf32> to vector<1x1xf32>
    %23 = vector.shape_cast %22 : vector<1x1xf32> to vector<1x1x1xf32>
    %c0_15 = arith.constant 0 : index
    %c0_16 = arith.constant 0 : index
    %c0_17 = arith.constant 0 : index
    %24 = vector.load %arg5[%c0_15, %c0_16, %c0_17] : memref<1x1x1xf32, #tpu.memory_space<vmem>>, vector<1x1x1xf32>
    tpu.vector_store %arg5[%c0_15, %c0_16, %c0_17], %23 {strides = array<i32>} : memref<1x1x1xf32, #tpu.memory_space<vmem>>, vector<1x1x1xf32>,
    return
  }
  func.func @transform_0(%arg0: i32) -> (i32, i32) {
    %c0_i32 = arith.constant 0 : i32
    %c0_i32_0 = arith.constant 0 : i32
    return %arg0, %c0_i32 : i32, i32
  }
  func.func @transform_1(%arg0: i32) -> (i32, i32) {
    %c0_i32 = arith.constant 0 : i32
    %c0_i32_0 = arith.constant 0 : i32
    %c0_i32_1 = arith.constant 0 : i32
    return %c0_i32, %c0_i32_0 : i32, i32
  }
  func.func @transform_2(%arg0: i32) -> (i32, i32) {
    %c0_i32 = arith.constant 0 : i32
    %c0_i32_0 = arith.constant 0 : i32
    %c0_i32_1 = arith.constant 0 : i32
    return %c0_i32, %c0_i32_0 : i32, i32
  }
  func.func @transform_3(%arg0: i32) -> (i32, i32) {
    %c0_i32 = arith.constant 0 : i32
    %c0_i32_0 = arith.constant 0 : i32
    return %arg0, %c0_i32 : i32, i32
  }
  func.func @transform_4(%arg0: i32) -> (i32, i32, i32) {
    %c0_i32 = arith.constant 0 : i32
    %c0_i32_0 = arith.constant 0 : i32
    %c0_i32_1 = arith.constant 0 : i32
    return %arg0, %c0_i32, %c0_i32_0 : i32, i32, i32
  }
}

</mosaic_0001>

<llo_original>
// kernel: tpu_custom_call.1
$region0: #{tpu_custom_call.1}
  #allocation0 [shape = 'u32[]', space=smem, size = 0x4, offset = 0x4, fixed_abs, tag = 'smem constant byte address 0x4 - core index']
  #allocation1 [shape = 'u32[144,128]{1,0:T(1,128)}', space=vmem, size = 0x12000, scoped, tag = 'internal scratch']
  %s0 = inlined_call_operand.hbm [shape: f32[16,128], index: 0, kind: input, shape index: {}]
  %s1 = inlined_call_operand.hbm [shape: f32[128,128], index: 1, kind: input, shape index: {}]
  %s2 = inlined_call_operand.vmem [shape: f32[1,128], index: 2, kind: input, shape index: {}]
  %s3 = inlined_call_operand.hbm [shape: f32[16,128], index: 3, kind: output, shape index: {0}]
  %s4 = inlined_call_operand.hbm [shape: f32[1,1,1], index: 4, kind: output, shape index: {1}]
  %5 = xla_tuple %s3, %s4
  %s6 = sld [smem:[#allocation0]]
  $region38: #{tpu_custom_call.1} parent=0
    _
  %s8 = ssub.s32 1, %s6
  %s9 = scalar_select 0, %s8, %s6
  $region1: #{tpu_custom_call.1} parent=0
    #allocation2 [shape = 'u8[8192]{0}', space=vmem, size = 0x2000, scoped, tag = 'input window, operand 0, single buffered']
    #allocation3 [shape = 's32[1]{0}', space=sflag, size = 0x4, scoped, tag = 'scoped memory for tpu_custom_call.1']
    #allocation4 [shape = 's32[1]{0}', space=sflag, size = 0x4, scoped, tag = 'scoped memory for tpu_custom_call.1']
    #allocation5 [shape = 'u8[65536]{0}', space=vmem, size = 0x10000, scoped, tag = 'input window, operand 1, single buffered']
    #allocation6 [shape = 's32[1]{0}', space=sflag, size = 0x4, scoped, tag = 'scoped memory for tpu_custom_call.1']
    #allocation7 [shape = 'u8[8192]{0}', space=vmem, size = 0x2000, scoped, tag = 'output window, operand 0, single buffered']
    #allocation8 [shape = 'u8[512]{0}', space=vmem, size = 0x400, scoped, tag = 'output window, operand 1, single buffered']
    #allocation9 [shape = 's32[1]{0}', space=sflag, size = 0x4, scoped, tag = 'scoped memory for tpu_custom_call.1']
    %10 = vsyncpa [#allocation3], 0
    %11 = vsyncpa [#allocation6], 0
    %12 = vsyncpa [#allocation4], 0
    %13 = vsyncpa [#allocation9], 0
    // Predicated region
    $region2: #{tpu_custom_call.1} parent=1 // pred_check
      _
    $region3: #{tpu_custom_call.1} parent=1 // pred_check_branch
      %15 = sbr.rel (0) target = $region5
    $region4: #{tpu_custom_call.1} parent=1 // pred_region
      %s17 = ssub.s32 256, 256
      %18 = vsyncadd [#allocation3], %s17
      %s19 = sshll.u32 [#allocation2], 4
      %s20 = int_to_ptr.vmem [resolvable:$true] %s19
      %25 = dma.hbm_to_vmem [thread:$0]  %s0, 256, %s20, [#allocation3], 128, 128, 8
    $region5: #{tpu_custom_call.1} parent=1 // pred_fallthru
      _
    // Predicated region
    $region6: #{tpu_custom_call.1} parent=1 // pred_check
      _
    $region7: #{tpu_custom_call.1} parent=1 // pred_check_branch
      %27 = sbr.rel (0) target = $region9
    $region8: #{tpu_custom_call.1} parent=1 // pred_region
      %s29 = ssub.s32 2048, 2048
      %30 = vsyncadd [#allocation6], %s29
      %s31 = sshll.u32 [#allocation5], 4
      %s32 = int_to_ptr.vmem [resolvable:$true] %s31
      %37 = dma.hbm_to_vmem [thread:$0]  %s1, 2048, %s32, [#allocation6], 128, 128, 8
    $region9: #{tpu_custom_call.1} parent=1 // pred_fallthru
      _
    // Predicated region
    $region10: #{tpu_custom_call.1} parent=1 // pred_check
      _
    $region11: #{tpu_custom_call.1} parent=1 // pred_check_branch
      %39 = sbr.rel (0) target = $region13
    $region12: #{tpu_custom_call.1} parent=1 // pred_region
      _
    $region13: #{tpu_custom_call.1} parent=1 // pred_fallthru
      _
    // Predicated region
    $region14: #{tpu_custom_call.1} parent=1 // pred_check
      _
    $region15: #{tpu_custom_call.1} parent=1 // pred_check_branch
      %41 = sbr.rel (0) target = $region17
    $region16: #{tpu_custom_call.1} parent=1 // pred_region
      %42 = dma.done [#allocation3], 256
    $region17: #{tpu_custom_call.1} parent=1 // pred_fallthru
      _
    // Predicated region
    $region18: #{tpu_custom_call.1} parent=1 // pred_check
      _
    $region19: #{tpu_custom_call.1} parent=1 // pred_check_branch
      %44 = sbr.rel (0) target = $region21
    $region20: #{tpu_custom_call.1} parent=1 // pred_region
      %45 = dma.done [#allocation6], 2048
    $region21: #{tpu_custom_call.1} parent=1 // pred_fallthru
      _
    %v46 = vld [vmem:[#allocation2] sm:$0xff]
    %v47 = vld [vmem:[#allocation2 + $0x8] sm:$0xff]
    %v48 = vld [vmem:[#allocation5] sm:$0xff]
    %v49 = vld [vmem:[#allocation5 + $0x8] sm:$0xff]
    %v50 = vld [vmem:[#allocation5 + $0x10] sm:$0xff]
    %v51 = vld [vmem:[#allocation5 + $0x18] sm:$0xff]
    %v52 = vld [vmem:[#allocation5 + $0x20] sm:$0xff]
    %v53 = vld [vmem:[#allocation5 + $0x28] sm:$0xff]
    %v54 = vld [vmem:[#allocation5 + $0x30] sm:$0xff]
    %v55 = vld [vmem:[#allocation5 + $0x38] sm:$0xff]
    %v56 = vld [vmem:[#allocation5 + $0x40] sm:$0xff]
    %v57 = vld [vmem:[#allocation5 + $0x48] sm:$0xff]
    %v58 = vld [vmem:[#allocation5 + $0x50] sm:$0xff]
    %v59 = vld [vmem:[#allocation5 + $0x58] sm:$0xff]
    %v60 = vld [vmem:[#allocation5 + $0x60] sm:$0xff]
    %v61 = vld [vmem:[#allocation5 + $0x68] sm:$0xff]
    %v62 = vld [vmem:[#allocation5 + $0x70] sm:$0xff]
    %v63 = vld [vmem:[#allocation5 + $0x78] sm:$0xff]
    %v64 = vld [vmem:[%s2] sm:$0x1]
    %v66 = vlaneseq
    %v67 = vshrl.u32 %v66, 7
    %v68 = vsub.s32 0, %v67
    %v69 = vrot.slane %v64, %v68
    %71 = vmatprep.subr.mxu0 0.0
    %72 = vmatpush1.msra.mxu0 %v63
    %73 = vmatprep.subr.mxu0 0.0
    %74 = vmatpush1.msra.mxu0 %v62
    %75 = vmatprep.subr.mxu0 0.0
    %76 = vmatpush1.msra.mxu0 %v61
    %77 = vmatprep.subr.mxu0 0.0
    %78 = vmatpush1.msra.mxu0 %v60
    %79 = vmatprep.subr.mxu0 0.0
    %80 = vmatpush1.msra.mxu0 %v59
    %81 = vmatprep.subr.mxu0 0.0
    %82 = vmatpush1.msra.mxu0 %v58
    %83 = vmatprep.subr.mxu0 0.0
    %84 = vmatpush1.msra.mxu0 %v57
    %85 = vmatprep.subr.mxu0 0.0
    %86 = vmatpush1.msra.mxu0 %v56
    %87 = vmatprep.subr.mxu0 0.0
    %88 = vmatpush1.msra.mxu0 %v55
    %89 = vmatprep.subr.mxu0 0.0
    %90 = vmatpush1.msra.mxu0 %v54
    %91 = vmatprep.subr.mxu0 0.0
    %92 = vmatpush1.msra.mxu0 %v53
    %93 = vmatprep.subr.mxu0 0.0
    %94 = vmatpush1.msra.mxu0 %v52
    %95 = vmatprep.subr.mxu0 0.0
    %96 = vmatpush1.msra.mxu0 %v51
    %97 = vmatprep.subr.mxu0 0.0
    %98 = vmatpush1.msra.mxu0 %v50
    %99 = vmatprep.subr.mxu0 0.0
    %100 = vmatpush1.msra.mxu0 %v49
    %101 = vmatprep.subr.mxu0 0.0
    %102 = vmatpush1.msra.mxu0 %v48
    %103 = vmatprep.subr.mxu0 0.0
    %104 = vmatpush2.msra.mxu0 0.0
    %105 = vmatprep.subr.mxu0 0.0
    %106 = vmatpush2.msra.mxu0 0.0
    %107 = vmatprep.subr.mxu0 0.0
    %108 = vmatpush2.msra.mxu0 0.0
    %109 = vmatprep.subr.mxu0 0.0
    %110 = vmatpush2.msra.mxu0 0.0
    %111 = vmatprep.subr.mxu0 0.0
    %112 = vmatpush2.msra.mxu0 0.0
    %113 = vmatprep.subr.mxu0 0.0
    %114 = vmatpush2.msra.mxu0 0.0
    %115 = vmatprep.subr.mxu0 0.0
    %116 = vmatpush2.msra.mxu0 0.0
    %117 = vmatprep.subr.mxu0 0.0
    %118 = vmatpush2.msra.mxu0 0.0
    %119 = vmatprep.subr.mxu0 0.0
    %120 = vmatpush2.msra.mxu0 0.0
    %121 = vmatprep.subr.mxu0 0.0
    %122 = vmatpush2.msra.mxu0 0.0
    %123 = vmatprep.subr.mxu0 0.0
    %124 = vmatpush2.msra.mxu0 0.0
    %125 = vmatprep.subr.mxu0 0.0
    %126 = vmatpush2.msra.mxu0 0.0
    %127 = vmatprep.subr.mxu0 0.0
    %128 = vmatpush2.msra.mxu0 0.0
    %129 = vmatprep.subr.mxu0 0.0
    %130 = vmatpush2.msra.mxu0 0.0
    %131 = vmatprep.subr.mxu0 0.0
    %132 = vmatpush2.msra.mxu0 0.0
    %133 = vmatprep.subr.mxu0 0.0
    %134 = vmatpush2.msra.mxu0 0.0
    %135 = vmatprep.mubr.f32.mxu0 0.0
    %136 = vmatmul.mubr.f32.gmra.mxu0 %v46
    %v137 = vpop.f32.mrf.mxu0
    %v138 = vadd.f32 %v69, %v137
    %v139 = vpop.f32.mrf.mxu0
    %140 = vmatprep.mubr.f32.mxu0 0.0
    %141 = vmatmul.mubr.f32.gmra.mxu0 %v47
    %v142 = vpop.f32.mrf.mxu0
    %v143 = vadd.f32 %v69, %v142
    %v144 = vpop.f32.mrf.mxu0
    %145 = vdwg.mxu0
    %v146 = vmax.f32 %v138, 0.0
    %v147 = vmax.f32 %v143, 0.0
    %v148 = vmin.f32 %v146, 6.0
    %v149 = vmin.f32 %v147, 6.0
    %v150 = vmul.f32 %v148, 0.16666667
    %v151 = vmul.f32 %v149, 0.16666667
    %v152 = vmul.f32 %v150, %v46
    %v153 = vmul.f32 %v151, %v47
    %154 = vst [vmem:[#allocation7] sm:$0xff] %v152
    %155 = vst [vmem:[#allocation7 + $0x8] sm:$0xff] %v153
    %vm156 = vcmp.gt.f32.partialorder %v138, 0.0
    %vm157 = vcmp.gt.f32.partialorder %v143, 0.0
    %v158 = vsel %vm156, 1.0, 0.0
    %v159 = vsel %vm157, 1.0, 0.0
    %160 = vadd.xlane.f32.xlu0 %v158
    %v161 = vpop.xlane.xlu0 %160
    %162 = vadd.xlane.f32.xlu0 %v159
    %v163 = vpop.xlane.xlu0 %162
    %v164 = vadd.f32 %v161, %v163
    %v165 = vrot.slane %v164, 4
    %v166 = vadd.f32 %v164, %v165
    %v167 = vrot.slane %v166, 2
    %v168 = vadd.f32 %v166, %v167
    %v169 = vrot.slane %v168, 1
    %v170 = vadd.f32 %v168, %v169
    %vm171 = vcmask 0
    %172 = vst.msk [vmem:[#allocation8] sm:$0x1] %vm171, %v170
    // Predicated region
    $region22: #{tpu_custom_call.1} parent=1 // pred_check
      _
    $region23: #{tpu_custom_call.1} parent=1 // pred_check_branch
      %174 = sbr.rel (0) target = $region25
    $region24: #{tpu_custom_call.1} parent=1 // pred_region
      %s176 = ssub.s32 256, 256
      %177 = vsyncadd [#allocation4], %s176
      %s178 = sshll.u32 [#allocation7], 4
      %s179 = int_to_ptr.vmem [resolvable:$true] %s178
      %184 = dma.vmem_to_hbm [thread:$0]  %s179, 256, %s3, [#allocation4], 128, 128, 8
    $region25: #{tpu_custom_call.1} parent=1 // pred_fallthru
      _
    // Predicated region
    $region26: #{tpu_custom_call.1} parent=1 // pred_check
      _
    $region27: #{tpu_custom_call.1} parent=1 // pred_check_branch
      %186 = sbr.rel (0) target = $region29
    $region28: #{tpu_custom_call.1} parent=1 // pred_region
      %s188 = ssub.s32 16, 16
      %189 = vsyncadd [#allocation9], %s188
      %s191 = sshll.u32 [#allocation8], 4
      %s192 = int_to_ptr.vmem [resolvable:$true] %s191
      %194 = dma.vmem_to_hbm [thread:$0]  %s192, 16, %s4, [#allocation9]
    $region29: #{tpu_custom_call.1} parent=1 // pred_fallthru
      _
    // Predicated region
    $region30: #{tpu_custom_call.1} parent=1 // pred_check
      _
    $region31: #{tpu_custom_call.1} parent=1 // pred_check_branch
      %196 = sbr.rel (0) target = $region33
    $region32: #{tpu_custom_call.1} parent=1 // pred_region
      %197 = dma.done [#allocation4], 256
    $region33: #{tpu_custom_call.1} parent=1 // pred_fallthru
      _
    // Predicated region
    $region34: #{tpu_custom_call.1} parent=1 // pred_check
      _
    $region35: #{tpu_custom_call.1} parent=1 // pred_check_branch
      %199 = sbr.rel (0) target = $region37
    $region36: #{tpu_custom_call.1} parent=1 // pred_region
      %200 = dma.done [#allocation9], 16
    $region37: #{tpu_custom_call.1} parent=1 // pred_fallthru
      _
    %201 = vsyncpa [#allocation3], 1
    %202 = vsyncpa [#allocation6], 1
    %203 = vsyncpa [#allocation4], 1
    %204 = vsyncpa [#allocation9], 1

</llo_original>
